<compile_context>
chip_gen: v6e
topology: v6e:2x2x1
jax: 0.10.0
libtpu: 0.0.40
codegen_flags: <defaults>
</compile_context>

<pallas_src>
import functools
import math

import jax
import jax.numpy as jnp
from jax import lax
from jax.experimental import pallas as pl
from jax.experimental.pallas import tpu as pltpu


# -----------------------------------------------------------------------------
# Tiling / sizing helpers
# -----------------------------------------------------------------------------
def _round_up(x, m):
    return ((x + m - 1) // m) * m


def _row_tiling(n, max_tile=256):
    """Row tile (multiple of 8, <= max_tile) plus cdiv-padded row count."""
    tile = min(max_tile, _round_up(n, 8))
    return tile, _round_up(n, tile)


def _pad_rows(x, n_pad):
    n = x.shape[0]
    if n_pad == n:
        return x
    return jnp.pad(x, ((0, n_pad - n), (0, 0)))


def _pick_heads_per_block(num_heads, head_dim, hidden, lane_target=256):
    """Pack heads so q/k/v/ctx tiles are ~256 lanes wide (512 B DMA chunks),
    while the block's last dim is a multiple of 128 or equals H (the (8,128)
    BlockSpec constraint)."""
    def ok(c):
        w = c * head_dim
        return w % 128 == 0 or w == hidden

    target = max(1, lane_target // max(1, head_dim))
    best = None
    for c in range(1, num_heads + 1):
        if num_heads % c != 0 or not ok(c):
            continue
        if c <= target:
            best = c            # largest valid divisor <= target
        elif best is None:
            best = c            # fallback: smallest valid divisor above target
            break
    return best if best is not None else num_heads


def _vmem_limit(est_bytes):
    """Explicit scoped-VMEM limit: estimate * headroom, clamped to ~87.5% of
    the physical VMEM of this generation (64 MiB v7x, 128 MiB v5e/v6e)."""
    try:
        cap = int(pltpu.get_tpu_info().vmem_capacity_bytes)
    except Exception:  # pragma: no cover - conservative fallback
        cap = 64 << 20
    ceiling = cap - (cap >> 3)
    return int(min(max(int(est_bytes * 1.5), 16 << 20), ceiling))


# -----------------------------------------------------------------------------
# Kernel 1: fused Q/K/V projection (row-tiled, weight-stationary).
# -----------------------------------------------------------------------------
def qkv_proj_kernel(x_ref, w_ref, b_ref, q_ref, k_ref, v_ref, *, hidden, q_scale):
    x = x_ref[...].astype(jnp.bfloat16)                               # [TM, H]
    acc = jnp.dot(x, w_ref[...], preferred_element_type=jnp.float32)  # [TM, 3H]
    acc = acc + b_ref[...]                                            # bias
    # 1/sqrt(d) folded into q here (S*d work) instead of scaling [S,S] scores.
    q_ref[...] = (acc[:, 0 * hidden:1 * hidden] * q_scale).astype(q_ref.dtype)
    k_ref[...] = acc[:, 1 * hidden:2 * hidden].astype(k_ref.dtype)
    v_ref[...] = acc[:, 2 * hidden:3 * hidden].astype(v_ref.dtype)


def qkv_projection(x2d, w_qkv_t, b_qkv, q_scale, *, max_tile=256):
    """x2d: [N,H] f32; w_qkv_t: [H,3H] bf16 (pre-transposed); b_qkv: [1,3H] f32."""
    n, h = x2d.shape
    tile_m, n_pad = _row_tiling(n, max_tile)
    x_p = _pad_rows(x2d, n_pad)
    grid = (n_pad // tile_m,)
    out_sds = jax.ShapeDtypeStruct((n_pad, h), jnp.bfloat16)

    vmem_est = (2 * tile_m * h * 4            # x f32 (double-buffered)
                + 3 * h * h * 2               # W_qkv bf16 (single-buffered)
                + 3 * h * 4                   # fused bias
                + 3 * 2 * tile_m * h * 2      # 3 bf16 outputs (double-buffered)
                + tile_m * 3 * h * 4)         # f32 accumulator temp
    cost = pl.CostEstimate(
        flops=2 * n_pad * h * 3 * h, transcendentals=0,
        bytes_accessed=n_pad * h * 4 + 3 * h * h * 2 + 3 * h * 4 + 3 * n_pad * h * 2)

    invariant = pl.Buffered(1)   # grid-invariant weight/bias: single buffer
    q, k, v = pl.pallas_call(
        functools.partial(qkv_proj_kernel, hidden=h, q_scale=q_scale),
        grid=grid,
        in_specs=[
            pl.BlockSpec((tile_m, h), lambda i: (i, 0)),                       # x
            pl.BlockSpec((h, 3 * h), lambda i: (0, 0), pipeline_mode=invariant),
            pl.BlockSpec((1, 3 * h), lambda i: (0, 0), pipeline_mode=invariant),
        ],
        out_specs=[pl.BlockSpec((tile_m, h), lambda i: (i, 0))] * 3,
        out_shape=(out_sds, out_sds, out_sds),
        compiler_params=pltpu.CompilerParams(
            dimension_semantics=("parallel",),
            vmem_limit_bytes=_vmem_limit(vmem_est)),
        cost_estimate=cost,
    )(x_p, w_qkv_t, b_qkv)
    if n_pad != n:
        q, k, v = q[:n], k[:n], v[:n]
    return q, k, v


# -----------------------------------------------------------------------------
# Kernel 2a: per (batch, head-block) attention — full [S,S] (probs optional).
# -----------------------------------------------------------------------------
def _attn_head_block(q_ref, k_ref, v_ref, mask, ctx_ref, probs_ref, *,
                     head_dim, heads_per_block):
    for hh in range(heads_per_block):                        # static, small loop
        sl = slice(hh * head_dim, (hh + 1) * head_dim)
        q = q_ref[:, sl]                                     # [S, d] bf16 (pre-scaled)
        k = k_ref[:, sl]
        v = v_ref[:, sl]
        scores = lax.dot_general(                            # q @ k^T, no k.T copy
            q, k, dimension_numbers=(((1,), (1,)), ((), ())),
            preferred_element_type=jnp.float32)              # [S, S] f32
        scores = scores + mask
        m = jnp.max(scores, axis=-1, keepdims=True)
        e = jnp.exp(scores - m)
        denom = jnp.sum(e, axis=-1, keepdims=True)
        probs = e * pl.reciprocal(denom, approx=True)        # EUP vrcp (~free slot)
        if probs_ref is not None:
            probs_ref[hh] = probs.astype(probs_ref.dtype)    # bf16 by default
        ctx = jnp.dot(probs.astype(jnp.bfloat16), v,
                      preferred_element_type=jnp.float32)    # [S, d] f32 acc
        ctx_ref[:, sl] = ctx.astype(ctx_ref.dtype)


def attn_kernel_probs(q_ref, k_ref, v_ref, mask_ref, ctx_ref, probs_ref, **kw):
    _attn_head_block(q_ref, k_ref, v_ref, mask_ref[...], ctx_ref, probs_ref, **kw)


def attn_kernel_ctx(q_ref, k_ref, v_ref, mask_ref, ctx_ref, **kw):
    _attn_head_block(q_ref, k_ref, v_ref, mask_ref[...], ctx_ref, None, **kw)


def attention_full(q, k, v, mask, *, num_heads, head_dim, return_probs,
                   probs_dtype=jnp.bfloat16):
    """q,k,v: [B,S,H] bf16 (q pre-scaled); mask: [B,1,1,S] additive f32."""
    b, s, h = q.shape
    hb = _pick_heads_per_block(num_heads, head_dim, h)
    n_hblk = num_heads // hb
    hbd = hb * head_dim
    sq = pl.Squeezed()

    qkv_spec = pl.BlockSpec((sq, s, hbd), lambda bi, hi: (bi, 0, hi))
    mask_spec = pl.BlockSpec((sq, sq, 1, s), lambda bi, hi: (bi, 0, 0, 0))
    ctx_spec = pl.BlockSpec((sq, s, hbd), lambda bi, hi: (bi, 0, hi))

    probs_bytes = jnp.dtype(probs_dtype).itemsize if return_probs else 0
    vmem_est = (3 * 2 * s * hbd * 2 + 2 * s * 4 + 2 * s * hbd * 2
                + 2 * hb * s * s * probs_bytes + 6 * s * s * 4)
    cost = pl.CostEstimate(
        flops=2 * 2 * b * num_heads * s * s * head_dim,
        transcendentals=b * num_heads * s * s,
        bytes_accessed=(3 * b * s * h * 2 + b * s * 4 + b * s * h * 2
                        + b * num_heads * s * s * max(probs_bytes, 1)))
    params = pltpu.CompilerParams(
        dimension_semantics=("parallel", "parallel"),
        vmem_limit_bytes=_vmem_limit(vmem_est))

    if return_probs:
        kernel = functools.partial(attn_kernel_probs, head_dim=head_dim,
                                   heads_per_block=hb)
        probs_spec = pl.BlockSpec((sq, hb, s, s), lambda bi, hi: (bi, hi, 0, 0))
        ctx, probs = pl.pallas_call(
            kernel, grid=(b, n_hblk),
            in_specs=[qkv_spec, qkv_spec, qkv_spec, mask_spec],
            out_specs=[ctx_spec, probs_spec],
            out_shape=(jax.ShapeDtypeStruct((b, s, h), jnp.bfloat16),
                       jax.ShapeDtypeStruct((b, num_heads, s, s), probs_dtype)),
            compiler_params=params, cost_estimate=cost,
        )(q, k, v, mask)
        return ctx, probs

    kernel = functools.partial(attn_kernel_ctx, head_dim=head_dim,
                               heads_per_block=hb)
    ctx = pl.pallas_call(
        kernel, grid=(b, n_hblk),
        in_specs=[qkv_spec, qkv_spec, qkv_spec, mask_spec],
        out_specs=ctx_spec,
        out_shape=jax.ShapeDtypeStruct((b, s, h), jnp.bfloat16),
        compiler_params=params, cost_estimate=cost,
    )(q, k, v, mask)
    return ctx, None


# -----------------------------------------------------------------------------
# Kernel 2b: KV-tiled online-softmax (flash) attention — ctx only, O(S*d) VMEM.
# -----------------------------------------------------------------------------
def flash_attn_kernel(q_ref, k_ref, v_ref, mask_ref, ctx_ref,
                      m_sc, l_sc, acc_sc, *, head_dim, heads_per_block):
    kv = pl.program_id(2)

    @pl.when(kv == 0)
    def _init():
        m_sc[...] = jnp.full(m_sc.shape, -jnp.inf, m_sc.dtype)
        l_sc[...] = jnp.zeros(l_sc.shape, l_sc.dtype)
        acc_sc[...] = jnp.zeros(acc_sc.shape, acc_sc.dtype)

    mask = mask_ref[...]                                     # [1, TKV] f32
    for hh in range(heads_per_block):                        # static, small loop
        sl = slice(hh * head_dim, (hh + 1) * head_dim)
        q = q_ref[:, sl]                                     # [S, d] bf16 (pre-scaled)
        k = k_ref[:, sl]                                     # [TKV, d]
        v = v_ref[:, sl]
        sc = lax.dot_general(
            q, k, dimension_numbers=(((1,), (1,)), ((), ())),
            preferred_element_type=jnp.float32) + mask       # [S, TKV] f32
        m_prev = m_sc[hh]                                    # [S, 1]
        m_new = jnp.maximum(m_prev, jnp.max(sc, axis=-1, keepdims=True))
        alpha = jnp.exp(m_prev - m_new)
        p = jnp.exp(sc - m_new)
        l_sc[hh] = alpha * l_sc[hh] + jnp.sum(p, axis=-1, keepdims=True)
        acc_sc[:, sl] = alpha * acc_sc[:, sl] + jnp.dot(
            p.astype(jnp.bfloat16), v, preferred_element_type=jnp.float32)
        m_sc[hh] = m_new

    @pl.when(kv == pl.num_programs(2) - 1)
    def _finalize():
        for hh in range(heads_per_block):
            sl = slice(hh * head_dim, (hh + 1) * head_dim)
            inv = pl.reciprocal(l_sc[hh], approx=True)
            ctx_ref[:, sl] = (acc_sc[:, sl] * inv).astype(ctx_ref.dtype)


def attention_flash(q, k, v, mask, *, num_heads, head_dim, kv_tile):
    b, s, h = q.shape
    hb = _pick_heads_per_block(num_heads, head_dim, h)
    n_hblk = num_heads // hb
    hbd = hb * head_dim
    n_kv = s // kv_tile
    sq = pl.Squeezed()

    q_spec = pl.BlockSpec((sq, s, hbd), lambda bi, hi, ki: (bi, 0, hi))
    kv_spec = pl.BlockSpec((sq, kv_tile, hbd), lambda bi, hi, ki: (bi, ki, hi))
    mask_spec = pl.BlockSpec((sq, sq, 1, kv_tile), lambda bi, hi, ki: (bi, 0, 0, ki))
    ctx_spec = pl.BlockSpec((sq, s, hbd), lambda bi, hi, ki: (bi, 0, hi))

    vmem_est = (2 * s * hbd * 2 + 2 * 2 * kv_tile * hbd * 2 + 2 * kv_tile * 4
                + 2 * s * hbd * 2 + 2 * hb * s * 128 * 4 + s * hbd * 4
                + 6 * s * kv_tile * 4)
    cost = pl.CostEstimate(
        flops=2 * 2 * b * num_heads * s * s * head_dim,
        transcendentals=b * num_heads * s * s,
        bytes_accessed=3 * b * s * h * 2 + b * s * 4 + b * s * h * 2)

    kernel = functools.partial(flash_attn_kernel, head_dim=head_dim,
                               heads_per_block=hb)
    return pl.pallas_call(
        kernel, grid=(b, n_hblk, n_kv),
        in_specs=[q_spec, kv_spec, kv_spec, mask_spec],
        out_specs=ctx_spec,
        out_shape=jax.ShapeDtypeStruct((b, s, h), jnp.bfloat16),
        scratch_shapes=[pltpu.VMEM((hb, s, 1), jnp.float32),   # running max
                        pltpu.VMEM((hb, s, 1), jnp.float32),   # running denom
                        pltpu.VMEM((s, hbd), jnp.float32)],    # ctx accumulator
        compiler_params=pltpu.CompilerParams(
            dimension_semantics=("parallel", "parallel", "arbitrary"),
            vmem_limit_bytes=_vmem_limit(vmem_est)),
        cost_estimate=cost,
    )(q, k, v, mask)


# -----------------------------------------------------------------------------
# Kernel 3: BertSelfOutput — dense + residual + LayerNorm, fused (row-tiled).
# -----------------------------------------------------------------------------
def self_output_kernel(ctx_ref, inp_ref, wo_ref, bo_ref, gamma_ref, beta_ref,
                       out_ref, *, eps):
    y = jnp.dot(ctx_ref[...], wo_ref[...], preferred_element_type=jnp.float32)
    y = y + bo_ref[...] + inp_ref[...]                       # bias + residual (f32)
    u = jnp.mean(y, axis=-1, keepdims=True)
    d = y - u
    var = jnp.mean(d * d, axis=-1, keepdims=True)
    inv = lax.rsqrt(var + eps)                               # EUP
    out_ref[...] = (gamma_ref[...] * (d * inv) + beta_ref[...]).astype(out_ref.dtype)


def self_output(ctx2d, inp2d, wo_t, bo, gamma, beta, *, eps=1e-12,
                out_dtype=jnp.float32, max_tile=256):
    """ctx2d: [N,H] bf16; inp2d: [N,H] f32; wo_t: [H,H] bf16 (pre-transposed)."""
    n, h = inp2d.shape
    tile_m, n_pad = _row_tiling(n, max_tile)
    ctx_p = _pad_rows(ctx2d, n_pad)
    inp_p = _pad_rows(inp2d, n_pad)
    grid = (n_pad // tile_m,)

    out_bytes = jnp.dtype(out_dtype).itemsize
    vmem_est = (2 * tile_m * h * 2 + 2 * tile_m * h * 4 + h * h * 2 + 6 * h * 4
                + 2 * tile_m * h * out_bytes + 2 * tile_m * h * 4)
    cost = pl.CostEstimate(
        flops=2 * n_pad * h * h, transcendentals=n_pad,
        bytes_accessed=(n_pad * h * 2 + n_pad * h * 4 + h * h * 2 + 3 * h * 4
                        + n_pad * h * out_bytes))

    row_spec = pl.BlockSpec((tile_m, h), lambda i: (i, 0))
    invariant = pl.Buffered(1)
    vec_spec = pl.BlockSpec((1, h), lambda i: (0, 0), pipeline_mode=invariant)
    out = pl.pallas_call(
        functools.partial(self_output_kernel, eps=eps),
        grid=grid,
        in_specs=[
            row_spec,                                        # ctx (bf16)
            row_spec,                                        # residual input (f32)
            pl.BlockSpec((h, h), lambda i: (0, 0), pipeline_mode=invariant),
            vec_spec, vec_spec, vec_spec,                    # bo, gamma, beta
        ],
        out_specs=row_spec,
        out_shape=jax.ShapeDtypeStruct((n_pad, h), out_dtype),
        compiler_params=pltpu.CompilerParams(
            dimension_semantics=("parallel",),
            vmem_limit_bytes=_vmem_limit(vmem_est)),
        cost_estimate=cost,
    )(ctx_p, inp_p, wo_t, bo, gamma, beta)
    return out[:n] if n_pad != n else out


# -----------------------------------------------------------------------------
# Module wrapper: BertAttention.forward (eval mode).
# -----------------------------------------------------------------------------
def bert_attention(hidden_states, attention_mask, params, *, num_heads, head_dim,
                   layer_norm_eps=1e-12, return_probs=True,
                   probs_dtype=jnp.bfloat16, flash_kv_tile=512,
                   out_dtype=jnp.float32):
    b, s, h = hidden_states.shape
    x2d = hidden_states.reshape(b * s, h)

    # One-time weight prep (static, outside kernels): fuse Q/K/V and transpose
    # to [in, out] so kernels run the plain MXU contraction (no in-kernel
    # transposed-RHS / XLU layout work).
    w_qkv_t = jnp.concatenate(
        [params["wq"], params["wk"], params["wv"]], axis=0).T.astype(jnp.bfloat16)
    b_qkv = jnp.concatenate([params["bq"], params["bk"], params["bv"]])[None, :]
    wo_t = params["wo"].T.astype(jnp.bfloat16)
    # TODO(synk): optional fp8 weight quantization for the v7x projection GEMMs.

    q_scale = 1.0 / math.sqrt(head_dim)
    q2d, k2d, v2d = qkv_projection(x2d, w_qkv_t, b_qkv, q_scale)

    # [B*S, H] -> [B, S, H] is a free metadata reshape; heads stay packed in H.
    q = q2d.reshape(b, s, h)
    k = k2d.reshape(b, s, h)
    v = v2d.reshape(b, s, h)

    if return_probs:
        # Module semantics (attention_probs returned) force the full [S,S]
        # materialization; probs emitted in bf16 to halve the HBM writeback.
        ctx, probs = attention_full(q, k, v, attention_mask, num_heads=num_heads,
                                    head_dim=head_dim, return_probs=True,
                                    probs_dtype=probs_dtype)
    elif (s > flash_kv_tile and s % flash_kv_tile == 0
          and flash_kv_tile % 128 == 0):
        # Long-sequence path: online softmax, O(S*d) VMEM, no S^2 stores.
        ctx = attention_flash(q, k, v, attention_mask, num_heads=num_heads,
                              head_dim=head_dim, kv_tile=flash_kv_tile)
        probs = None
    else:
        ctx, probs = attention_full(q, k, v, attention_mask, num_heads=num_heads,
                                    head_dim=head_dim, return_probs=False)

    attn_out2d = self_output(
        ctx.reshape(b * s, h), x2d, wo_t, params["bo"][None, :],
        params["ln_gamma"][None, :], params["ln_beta"][None, :],
        eps=layer_norm_eps, out_dtype=out_dtype)
    return attn_out2d.reshape(b, s, h), probs


if __name__ == "__main__":
    # Small config consistent with the module: hidden=32, 4 heads, head_dim=8.
    H, NH = 32, 4
    D = H // NH

    key = jax.random.PRNGKey(0)
    keys = jax.random.split(key, 14)

    params = {
        "wq": jax.random.normal(keys[0], (H, H), jnp.float32) * 0.02,
        "bq": jax.random.normal(keys[1], (H,), jnp.float32) * 0.02,
        "wk": jax.random.normal(keys[2], (H, H), jnp.float32) * 0.02,
        "bk": jax.random.normal(keys[3], (H,), jnp.float32) * 0.02,
        "wv": jax.random.normal(keys[4], (H, H), jnp.float32) * 0.02,
        "bv": jax.random.normal(keys[5], (H,), jnp.float32) * 0.02,
        "wo": jax.random.normal(keys[6], (H, H), jnp.float32) * 0.02,
        "bo": jax.random.normal(keys[7], (H,), jnp.float32) * 0.02,
        "ln_gamma": 1.0 + jax.random.normal(keys[8], (H,), jnp.float32) * 0.02,
        "ln_beta": jax.random.normal(keys[9], (H,), jnp.float32) * 0.02,
    }

    def ref_forward(x, mask, nh, d):
        b, s, h = x.shape
        q = x @ params["wq"].T + params["bq"]
        k = x @ params["wk"].T + params["bk"]
        v = x @ params["wv"].T + params["bv"]
        sh = lambda t: t.reshape(b, s, nh, d).transpose(0, 2, 1, 3)
        q, k, v = sh(q), sh(k), sh(v)
        sc = jnp.einsum("bhqd,bhkd->bhqk", q, k) / math.sqrt(d) + mask
        p = jax.nn.softmax(sc, axis=-1)
        c = jnp.einsum("bhqk,bhkd->bhqd", p, v)
        c = c.transpose(0, 2, 1, 3).reshape(b, s, h)
        y = c @ params["wo"].T + params["bo"] + x
        u = y.mean(-1, keepdims=True)
        s2 = ((y - u) ** 2).mean(-1, keepdims=True)
        y = (y - u) / jnp.sqrt(s2 + 1e-12)
        return params["ln_gamma"] * y + params["ln_beta"], p

    # --- Test 1: module-faithful path (returns attention probs). ---
    B, S = 2, 8
    hidden_states = jax.random.normal(keys[10], (B, S, H), jnp.float32)
    keep = (jax.random.uniform(keys[11], (B, 1, 1, S)) > 0.2).astype(jnp.float32)
    attention_mask = (1.0 - keep) * -10000.0

    out, probs = bert_attention(hidden_states, attention_mask, params,
                                num_heads=NH, head_dim=D)
    jax.block_until_ready((out, probs))

    ref_out, ref_probs = ref_forward(hidden_states, attention_mask, NH, D)
    assert jnp.allclose(out, ref_out, atol=2e-2, rtol=2e-2), "output mismatch"
    assert jnp.allclose(probs.astype(jnp.float32), ref_probs,
                        atol=2e-2, rtol=2e-2), "probs mismatch"

    # --- Test 2: long-sequence flash path (probs not requested), small KV tile
    #     so the online-softmax kernel is exercised with 2 KV blocks. ---
    B2, S2 = 1, 256
    hs2 = jax.random.normal(keys[12], (B2, S2, H), jnp.float32)
    keep2 = (jax.random.uniform(keys[13], (B2, 1, 1, S2)) > 0.2).astype(jnp.float32)
    mask2 = (1.0 - keep2) * -10000.0

    out2, probs2 = bert_attention(hs2, mask2, params, num_heads=NH, head_dim=D,
                                  return_probs=False, flash_kv_tile=128)
    jax.block_until_ready(out2)
    ref_out2, _ = ref_forward(hs2, mask2, NH, D)
    assert probs2 is None
    assert jnp.allclose(out2, ref_out2, atol=2e-2, rtol=2e-2), "flash output mismatch"

    print("KERNEL_OK")
</pallas_src>

<mosaic_0001>
module attributes {stable_mosaic.version = 11 : i64} {
  func.func @qkv_proj_kernel(%arg0: i32, %arg1: memref<16x32xf32, #tpu.memory_space<vmem>>, %arg2: memref<32x96xbf16, #tpu.memory_space<vmem>>, %arg3: memref<1x96xf32, #tpu.memory_space<vmem>>, %arg4: memref<16x32xbf16, #tpu.memory_space<vmem>>, %arg5: memref<16x32xbf16, #tpu.memory_space<vmem>>, %arg6: memref<16x32xbf16, #tpu.memory_space<vmem>>) attributes {dimension_semantics = [#tpu.dimension_semantics<parallel>], iteration_bounds = array<i64: 1>, scalar_prefetch = 0 : i64, scratch_operands = 0 : i64, tpu.core_type = #tpu.core_type<tc>, window_params = [{transform_indices = @transform_0, window_bounds = array<i64: 16, 32>}, {pipeline_mode = #tpu.pipeline_mode<synchronous>, transform_indices = @transform_1, window_bounds = array<i64: 32, 96>}, {pipeline_mode = #tpu.pipeline_mode<synchronous>, transform_indices = @transform_2, window_bounds = array<i64: 1, 96>}, {transform_indices = @transform_3, window_bounds = array<i64: 16, 32>}, {transform_indices = @transform_4, window_bounds = array<i64: 16, 32>}, {transform_indices = @transform_5, window_bounds = array<i64: 16, 32>}]} {
    %c0 = arith.constant 0 : index
    %c0_0 = arith.constant 0 : index
    %0 = vector.load %arg1[%c0, %c0_0] : memref<16x32xf32, #tpu.memory_space<vmem>>, vector<16x32xf32>
    %1 = arith.truncf %0 : vector<16x32xf32> to vector<16x32xbf16>
    %c0_1 = arith.constant 0 : index
    %c0_2 = arith.constant 0 : index
    %2 = vector.load %arg2[%c0_1, %c0_2] : memref<32x96xbf16, #tpu.memory_space<vmem>>, vector<32x96xbf16>
    %cst = arith.constant dense<0.000000e+00> : vector<16x96xf32>
    %3 = tpu.matmul %1, %2, %cst {dimension_numbers = #tpu.dot_dimension_numbers<[1], [0], [0], [1], [0, 0, 1, 1], [], []>} : vector<16x32xbf16>, vector<32x96xbf16>, vector<16x96xf32> -> vector<16x96xf32>
    %c0_3 = arith.constant 0 : index
    %c0_4 = arith.constant 0 : index
    %4 = vector.load %arg3[%c0_3, %c0_4] : memref<1x96xf32, #tpu.memory_space<vmem>>, vector<1x96xf32>
    %5 = vector.broadcast %4 : vector<1x96xf32> to vector<16x96xf32>
    %6 = arith.addf %3, %5 : vector<16x96xf32>
    %7 = vector.extract_strided_slice %6 {offsets = [0, 0], sizes = [16, 32], strides = [1, 1]} : vector<16x96xf32> to vector<16x32xf32>
    %cst_5 = arith.constant 0.353553385 : f32
    %8 = vector.broadcast %cst_5 : f32 to vector<16x32xf32>
    %9 = arith.mulf %7, %8 : vector<16x32xf32>
    %10 = arith.truncf %9 : vector<16x32xf32> to vector<16x32xbf16>
    %c0_6 = arith.constant 0 : index
    %c0_7 = arith.constant 0 : index
    %11 = vector.load %arg4[%c0_6, %c0_7] : memref<16x32xbf16, #tpu.memory_space<vmem>>, vector<16x32xbf16>
    tpu.vector_store %arg4[%c0_6, %c0_7], %10 {strides = array<i32>} : memref<16x32xbf16, #tpu.memory_space<vmem>>, vector<16x32xbf16>,
    %12 = vector.extract_strided_slice %6 {offsets = [0, 32], sizes = [16, 32], strides = [1, 1]} : vector<16x96xf32> to vector<16x32xf32>
    %13 = arith.truncf %12 : vector<16x32xf32> to vector<16x32xbf16>
    %c0_8 = arith.constant 0 : index
    %c0_9 = arith.constant 0 : index
    %14 = vector.load %arg5[%c0_8, %c0_9] : memref<16x32xbf16, #tpu.memory_space<vmem>>, vector<16x32xbf16>
    tpu.vector_store %arg5[%c0_8, %c0_9], %13 {strides = array<i32>} : memref<16x32xbf16, #tpu.memory_space<vmem>>, vector<16x32xbf16>,
    %15 = vector.extract_strided_slice %6 {offsets = [0, 64], sizes = [16, 32], strides = [1, 1]} : vector<16x96xf32> to vector<16x32xf32>
    %16 = arith.truncf %15 : vector<16x32xf32> to vector<16x32xbf16>
    %c0_10 = arith.constant 0 : index
    %c0_11 = arith.constant 0 : index
    %17 = vector.load %arg6[%c0_10, %c0_11] : memref<16x32xbf16, #tpu.memory_space<vmem>>, vector<16x32xbf16>
    tpu.vector_store %arg6[%c0_10, %c0_11], %16 {strides = array<i32>} : memref<16x32xbf16, #tpu.memory_space<vmem>>, vector<16x32xbf16>,
    return
  }
  func.func @transform_0(%arg0: i32) -> (i32, i32) {
    %c0_i32 = arith.constant 0 : i32
    %c0_i32_0 = arith.constant 0 : i32
    return %arg0, %c0_i32 : i32, i32
  }
  func.func @transform_1(%arg0: i32) -> (i32, i32) {
    %c0_i32 = arith.constant 0 : i32
    %c0_i32_0 = arith.constant 0 : i32
    %c0_i32_1 = arith.constant 0 : i32
    return %c0_i32, %c0_i32_0 : i32, i32
  }
  func.func @transform_2(%arg0: i32) -> (i32, i32) {
    %c0_i32 = arith.constant 0 : i32
    %c0_i32_0 = arith.constant 0 : i32
    %c0_i32_1 = arith.constant 0 : i32
    return %c0_i32, %c0_i32_0 : i32, i32
  }
  func.func @transform_3(%arg0: i32) -> (i32, i32) {
    %c0_i32 = arith.constant 0 : i32
    %c0_i32_0 = arith.constant 0 : i32
    return %arg0, %c0_i32 : i32, i32
  }
  func.func @transform_4(%arg0: i32) -> (i32, i32) {
    %c0_i32 = arith.constant 0 : i32
    %c0_i32_0 = arith.constant 0 : i32
    return %arg0, %c0_i32 : i32, i32
  }
  func.func @transform_5(%arg0: i32) -> (i32, i32) {
    %c0_i32 = arith.constant 0 : i32
    %c0_i32_0 = arith.constant 0 : i32
    return %arg0, %c0_i32 : i32, i32
  }
}

</mosaic_0001>

<llo_original>
// kernel: tpu_custom_call.1
$region0: #{tpu_custom_call.1}
  #allocation0 [shape = 'u32[]', space=smem, size = 0x4, offset = 0x4, fixed_abs, tag = 'smem constant byte address 0x4 - core index']
  #allocation1 [shape = 'u32[144,128]{1,0:T(1,128)}', space=vmem, size = 0x12000, scoped, tag = 'internal scratch']
  %s0 = inlined_call_operand.hbm [shape: f32[16,32], index: 0, kind: input, shape index: {}]
  %s1 = inlined_call_operand.hbm [shape: bf16[32,96], index: 1, kind: input, shape index: {}]
  %s2 = inlined_call_operand.vmem [shape: f32[1,96], index: 2, kind: input, shape index: {}]
  %s3 = inlined_call_operand.hbm [shape: bf16[16,32], index: 3, kind: output, shape index: {0}]
  %s4 = inlined_call_operand.hbm [shape: bf16[16,32], index: 4, kind: output, shape index: {1}]
  %s5 = inlined_call_operand.hbm [shape: bf16[16,32], index: 5, kind: output, shape index: {2}]
  %6 = xla_tuple %s3, %s4, %s5
  %s7 = sld [smem:[#allocation0]]
  $region46: #{tpu_custom_call.1} parent=0
    _
  %s9 = ssub.s32 1, %s7
  %s10 = scalar_select 0, %s9, %s7
  $region1: #{tpu_custom_call.1} parent=0
    #allocation2 [shape = 'u8[8192]{0}', space=vmem, size = 0x2000, scoped, tag = 'input window, operand 0, single buffered']
    #allocation3 [shape = 's32[1]{0}', space=sflag, size = 0x4, scoped, tag = 'scoped memory for tpu_custom_call.1']
    #allocation4 [shape = 's32[1]{0}', space=sflag, size = 0x4, scoped, tag = 'scoped memory for tpu_custom_call.1']
    #allocation5 [shape = 'u8[8192]{0}', space=vmem, size = 0x2000, scoped, tag = 'input window, operand 1, single buffered']
    #allocation6 [shape = 's32[1]{0}', space=sflag, size = 0x4, scoped, tag = 'scoped memory for tpu_custom_call.1']
    #allocation7 [shape = 'u8[4096]{0}', space=vmem, size = 0x1000, scoped, tag = 'output window, operand 0, single buffered']
    #allocation8 [shape = 'u8[4096]{0}', space=vmem, size = 0x1000, scoped, tag = 'output window, operand 1, single buffered']
    #allocation9 [shape = 's32[1]{0}', space=sflag, size = 0x4, scoped, tag = 'scoped memory for tpu_custom_call.1']
    #allocation10 [shape = 'u8[4096]{0}', space=vmem, size = 0x1000, scoped, tag = 'output window, operand 2, single buffered']
    %11 = vsyncpa [#allocation3], 0
    %12 = vsyncpa [#allocation6], 0
    %13 = vsyncpa [#allocation4], 0
    %14 = vsyncpa [#allocation9], 0
    // Predicated region
    $region2: #{tpu_custom_call.1} parent=1 // pred_check
      _
    $region3: #{tpu_custom_call.1} parent=1 // pred_check_branch
      %16 = sbr.rel (0) target = $region5
    $region4: #{tpu_custom_call.1} parent=1 // pred_region
      %s18 = ssub.s32 256, 256
      %19 = vsyncadd [#allocation3], %s18
      %s20 = sshll.u32 [#allocation2], 4
      %s21 = int_to_ptr.vmem [resolvable:$true] %s20
      %26 = dma.hbm_to_vmem [thread:$0]  %s0, 256, %s21, [#allocation3], 128, 128, 8
    $region5: #{tpu_custom_call.1} parent=1 // pred_fallthru
      _
    // Predicated region
    $region6: #{tpu_custom_call.1} parent=1 // pred_check
      _
    $region7: #{tpu_custom_call.1} parent=1 // pred_check_branch
      %28 = sbr.rel (0) target = $region9
    $region8: #{tpu_custom_call.1} parent=1 // pred_region
      %s30 = ssub.s32 256, 256
      %31 = vsyncadd [#allocation6], %s30
      %s32 = sshll.u32 [#allocation5], 4
      %s33 = int_to_ptr.vmem [resolvable:$true] %s32
      %38 = dma.hbm_to_vmem [thread:$0]  %s1, 256, %s33, [#allocation6], 64, 64, 4
    $region9: #{tpu_custom_call.1} parent=1 // pred_fallthru
      _
    // Predicated region
    $region10: #{tpu_custom_call.1} parent=1 // pred_check
      _
    $region11: #{tpu_custom_call.1} parent=1 // pred_check_branch
      %40 = sbr.rel (0) target = $region13
    $region12: #{tpu_custom_call.1} parent=1 // pred_region
      _
    $region13: #{tpu_custom_call.1} parent=1 // pred_fallthru
      _
    // Predicated region
    $region14: #{tpu_custom_call.1} parent=1 // pred_check
      _
    $region15: #{tpu_custom_call.1} parent=1 // pred_check_branch
      %42 = sbr.rel (0) target = $region17
    $region16: #{tpu_custom_call.1} parent=1 // pred_region
      %43 = dma.done [#allocation3], 256
    $region17: #{tpu_custom_call.1} parent=1 // pred_fallthru
      _
    // Predicated region
    $region18: #{tpu_custom_call.1} parent=1 // pred_check
      _
    $region19: #{tpu_custom_call.1} parent=1 // pred_check_branch
      %45 = sbr.rel (0) target = $region21
    $region20: #{tpu_custom_call.1} parent=1 // pred_region
      %46 = dma.done [#allocation6], 256
    $region21: #{tpu_custom_call.1} parent=1 // pred_fallthru
      _
    %v48 = vld [vmem:[#allocation2] sm:$0xff]
    %v49 = vld [vmem:[#allocation2 + $0x8] sm:$0xff]
    %v50 = vpack.c.bf16 %v49, %v48
    %v51 = vld [vmem:[#allocation5] sm:$0xf]
    %v52 = vld [vmem:[#allocation5 + $0x4] sm:$0xf]
    %v53 = vld [vmem:[#allocation5 + $0x8] sm:$0xf]
    %v54 = vld [vmem:[#allocation5 + $0xc] sm:$0xf]
    %v55 = vld [vmem:[%s2] sm:$0x1]
    %v57 = vlaneseq
    %v58 = vshrl.u32 %v57, 7
    %v59 = vsub.s32 0, %v58
    %v60 = vrot.slane %v55, %v59
    %v66 = vunpack.c.l.b16 %v51
    %v67 = vunpack.c.l.b16 %v52
    %v68 = vunpack.c.l.b16 %v53
    %v69 = vunpack.c.l.b16 %v54
    %v70 = vpack.c.b16 %v67, %v66
    %v71 = vpack.c.b16 %v69, %v68
    %vm74 = vcmask 261120
    %v76 = vsel %vm74, %v50, 0
    %78 = vmatprep.subr.bf16.mxu0 0
    %79 = vmatpush1.bf16.msra.mxu0 0
    %80 = vmatprep.subr.bf16.mxu0 0
    %81 = vmatpush1.bf16.msra.mxu0 0
    %82 = vmatprep.subr.bf16.mxu0 0
    %83 = vmatpush1.bf16.msra.mxu0 0
    %84 = vmatprep.subr.bf16.mxu0 0
    %85 = vmatpush1.bf16.msra.mxu0 0
    %86 = vmatprep.subr.bf16.mxu0 0
    %87 = vmatpush1.bf16.msra.mxu0 0
    %88 = vmatprep.subr.bf16.mxu0 0
    %89 = vmatpush1.bf16.msra.mxu0 0
    %90 = vmatprep.subr.bf16.mxu0 0
    %91 = vmatpush1.bf16.msra.mxu0 %v71
    %92 = vmatprep.subr.bf16.mxu0 0
    %93 = vmatpush1.bf16.msra.mxu0 %v70
    %94 = vmatprep.subr.bf16.mxu0 0
    %95 = vmatpush2.bf16.msra.mxu0 0
    %96 = vmatprep.subr.bf16.mxu0 0
    %97 = vmatpush2.bf16.msra.mxu0 0
    %98 = vmatprep.subr.bf16.mxu0 0
    %99 = vmatpush2.bf16.msra.mxu0 0
    %100 = vmatprep.subr.bf16.mxu0 0
    %101 = vmatpush2.bf16.msra.mxu0 0
    %102 = vmatprep.subr.bf16.mxu0 0
    %103 = vmatpush2.bf16.msra.mxu0 0
    %104 = vmatprep.subr.bf16.mxu0 0
    %105 = vmatpush2.bf16.msra.mxu0 0
    %106 = vmatprep.subr.bf16.mxu0 0
    %107 = vmatpush2.bf16.msra.mxu0 0
    %108 = vmatprep.subr.bf16.mxu0 0
    %109 = vmatpush2.bf16.msra.mxu0 0
    %110 = vmatprep.mubr.bf16.mxu0 0
    %111 = vmatmul.mubr.bf16.gmra.mxu0 %v76
    %v112 = vpop.f32.mrf.mxu0
    %v113 = vadd.f32 %v60, %v112
    %v114 = vpop.f32.mrf.mxu0
    %v115 = vpop.f32.mrf.mxu0
    %v116 = vadd.f32 %v60, %v115
    %v117 = vpop.f32.mrf.mxu0
    %118 = vdwg.mxu0
    %v119 = vmul.f32 %v113, 0.35355338
    %v120 = vmul.f32 %v116, 0.35355338
    %v121 = vpack.c.bf16 %v120, %v119
    %v123 = vunpack.c.l.b16 %v121
    %v124 = vunpack.c.h.b16 %v121
    %v125 = vpack.c.b16 %v123, %v123
    %v126 = vpack.c.b16 %v124, %v124
    %vm129 = vcmask 257024
    %130 = vst.msk [vmem:[#allocation7] sm:$0xf] %vm129, %v125
    %131 = vst.msk [vmem:[#allocation7 + $0x4] sm:$0xf] %vm129, %v126
    %v132 = vpack.c.bf16 %v116, %v113
    %v134 = vunpack.c.l.b16 %v132
    %v135 = vunpack.c.h.b16 %v132
    %v136 = vpack.c.b16 %v134, %v134
    %v137 = vpack.c.b16 %v135, %v135
    %138 = vrot.lane.b32.xlu0 %v136, 96
    %v139 = vpop.permute.xlu0 %138
    %140 = vrot.lane.b32.xlu0 %v137, 96
    %v141 = vpop.permute.xlu0 %140
    %144 = vst.msk [vmem:[#allocation8] sm:$0xf] %vm129, %v139
    %145 = vst.msk [vmem:[#allocation8 + $0x4] sm:$0xf] %vm129, %v141
    %146 = vrot.lane.b32.xlu0 %v136, 64
    %v147 = vpop.permute.xlu0 %146
    %148 = vrot.lane.b32.xlu0 %v137, 64
    %v149 = vpop.permute.xlu0 %148
    %152 = vst.msk [vmem:[#allocation10] sm:$0xf] %vm129, %v147
    %153 = vst.msk [vmem:[#allocation10 + $0x4] sm:$0xf] %vm129, %v149
    // Predicated region
    $region22: #{tpu_custom_call.1} parent=1 // pred_check
      _
    $region23: #{tpu_custom_call.1} parent=1 // pred_check_branch
      %155 = sbr.rel (0) target = $region25
    $region24: #{tpu_custom_call.1} parent=1 // pred_region
      %s157 = ssub.s32 128, 128
      %158 = vsyncadd [#allocation4], %s157
      %s159 = sshll.u32 [#allocation7], 4
      %s160 = int_to_ptr.vmem [resolvable:$true] %s159
      %165 = dma.vmem_to_hbm [thread:$0]  %s160, 128, %s3, [#allocation4], 64, 64, 4
    $region25: #{tpu_custom_call.1} parent=1 // pred_fallthru
      _
    // Predicated region
    $region26: #{tpu_custom_call.1} parent=1 // pred_check
      _
    $region27: #{tpu_custom_call.1} parent=1 // pred_check_branch
      %167 = sbr.rel (0) target = $region29
    $region28: #{tpu_custom_call.1} parent=1 // pred_region
      %s169 = ssub.s32 128, 128
      %170 = vsyncadd [#allocation9], %s169
      %s171 = sshll.u32 [#allocation8], 4
      %s172 = int_to_ptr.vmem [resolvable:$true] %s171
      %177 = dma.vmem_to_hbm [thread:$0]  %s172, 128, %s4, [#allocation9], 64, 64, 4
    $region29: #{tpu_custom_call.1} parent=1 // pred_fallthru
      _
    // Predicated region
    $region30: #{tpu_custom_call.1} parent=1 // pred_check
      _
    $region31: #{tpu_custom_call.1} parent=1 // pred_check_branch
      %179 = sbr.rel (0) target = $region33
    $region32: #{tpu_custom_call.1} parent=1 // pred_region
      %s181 = ssub.s32 128, 128
      %182 = vsyncadd [#allocation9], %s181
      %s183 = sshll.u32 [#allocation10], 4
      %s184 = int_to_ptr.vmem [resolvable:$true] %s183
      %189 = dma.vmem_to_hbm [thread:$0]  %s184, 128, %s5, [#allocation9], 64, 64, 4
    $region33: #{tpu_custom_call.1} parent=1 // pred_fallthru
      _
    // Predicated region
    $region34: #{tpu_custom_call.1} parent=1 // pred_check
      _
    $region35: #{tpu_custom_call.1} parent=1 // pred_check_branch
      %191 = sbr.rel (0) target = $region37
    $region36: #{tpu_custom_call.1} parent=1 // pred_region
      %192 = dma.done [#allocation4], 128
    $region37: #{tpu_custom_call.1} parent=1 // pred_fallthru
      _
    // Predicated region
    $region38: #{tpu_custom_call.1} parent=1 // pred_check
      _
    $region39: #{tpu_custom_call.1} parent=1 // pred_check_branch
      %194 = sbr.rel (0) target = $region41
    $region40: #{tpu_custom_call.1} parent=1 // pred_region
      %195 = dma.done [#allocation9], 128
    $region41: #{tpu_custom_call.1} parent=1 // pred_fallthru
      _
    // Predicated region
    $region42: #{tpu_custom_call.1} parent=1 // pred_check
      _
    $region43: #{tpu_custom_call.1} parent=1 // pred_check_branch
      %197 = sbr.rel (0) target = $region45
    $region44: #{tpu_custom_call.1} parent=1 // pred_region
      %198 = dma.done [#allocation9], 128
    $region45: #{tpu_custom_call.1} parent=1 // pred_fallthru
      _
    %199 = vsyncpa [#allocation3], 1
    %200 = vsyncpa [#allocation6], 1
    %201 = vsyncpa [#allocation4], 1
    %202 = vsyncpa [#allocation9], 1

</llo_original>
